<compile_context>
chip_gen: v7x
topology: tpu7x:2x2x1
jax: 0.10.0
libtpu: 0.0.40
codegen_flags: <defaults>
</compile_context>

<pallas_src>
import functools

import jax
import jax.numpy as jnp
from jax import lax
from jax.experimental import pallas as pl
from jax.experimental.pallas import tpu as pltpu

_LANES = 128          # padded class axis -> lane-dense output
_HEAD2_OFFSET = 64    # head2 logits occupy lanes [64, 64 + n2)
_NEG_INF = -1e30      # padded-lane bias: exp() underflows to exactly 0


def _round_up(x, m):
    return (x + m - 1) // m * m


def _classification_kernel(x_ref, w1_ref, b1_ref, wh_ref, bh_ref, out_ref):
    # ---- feature extractor: Linear + ReLU (MXU, f32 accumulation) ----
    h = jnp.dot(x_ref[...], w1_ref[...], preferred_element_type=jnp.float32)
    h = jnp.maximum(h + b1_ref[...], 0.0)

    # ---- both heads fused into a single lane-dense (tile_b, 128) matmul ----
    logits = jnp.dot(h, wh_ref[...], preferred_element_type=jnp.float32) + bh_ref[...]

    # Segmented softmax: lanes [0, 64) -> head1, lanes [64, 128) -> head2.
    # Padded lanes carry logit ~= -1e30, so they contribute exactly 0.
    lane = lax.broadcasted_iota(jnp.int32, logits.shape, 1)
    in_h2 = lane >= _HEAD2_OFFSET

    m1 = jnp.max(jnp.where(in_h2, _NEG_INF, logits), axis=-1, keepdims=True)
    m2 = jnp.max(jnp.where(in_h2, logits, _NEG_INF), axis=-1, keepdims=True)
    e = jnp.exp(logits - jnp.where(in_h2, m2, m1))

    s1 = jnp.sum(jnp.where(in_h2, 0.0, e), axis=-1, keepdims=True)
    s2 = jnp.sum(jnp.where(in_h2, e, 0.0), axis=-1, keepdims=True)
    # Select the per-head denominator first, then a single exact reciprocal.
    inv = pl.reciprocal(jnp.where(in_h2, s2, s1), approx=False)

    out_ref[...] = e * inv


@functools.partial(jax.jit, static_argnames=("tile_b",))
def classification_model(x, params, *, tile_b=256):
    """Full forward pass in one fused Pallas kernel, tiled over batch."""
    w1, b1, wh1, bh1, wh2, bh2 = params
    batch, dim_input = x.shape
    dim_hidden = w1.shape[1]
    n1 = wh1.shape[1]
    n2 = wh2.shape[1]
    assert n1 <= _HEAD2_OFFSET and n2 <= _LANES - _HEAD2_OFFSET

    # Pack both heads into one (dim_hidden, 128) weight / (1, 128) bias.
    wh = jnp.zeros((dim_hidden, _LANES), jnp.float32)
    wh = wh.at[:, :n1].set(wh1)
    wh = wh.at[:, _HEAD2_OFFSET:_HEAD2_OFFSET + n2].set(wh2)
    bh = jnp.full((1, _LANES), _NEG_INF, jnp.float32)
    bh = bh.at[:, :n1].set(bh1)
    bh = bh.at[:, _HEAD2_OFFSET:_HEAD2_OFFSET + n2].set(bh2)

    # Batch tiling: pad to a multiple of tile_b so every grid step sees a
    # full (8,128)-aligned block; the pad rows are sliced away afterwards.
    tile_b = min(tile_b, _round_up(batch, 8))
    padded_batch = _round_up(batch, tile_b)
    if padded_batch != batch:
        x = jnp.pad(x, ((0, padded_batch - batch), (0, 0)))
    grid = (padded_batch // tile_b,)

    flops = (2 * padded_batch * dim_input * dim_hidden
             + 2 * padded_batch * dim_hidden * _LANES)
    bytes_accessed = 4 * (padded_batch * dim_input
                          + dim_input * dim_hidden + dim_hidden
                          + dim_hidden * _LANES + _LANES
                          + padded_batch * _LANES)

    out = pl.pallas_call(
        _classification_kernel,
        out_shape=jax.ShapeDtypeStruct((padded_batch, _LANES), jnp.float32),
        grid_spec=pltpu.PrefetchScalarGridSpec(
            num_scalar_prefetch=0,
            grid=grid,
            in_specs=[
                pl.BlockSpec((tile_b, dim_input), lambda i: (i, 0)),
                # Weights/biases: constant index_map -> stay resident in VMEM.
                pl.BlockSpec((dim_input, dim_hidden), lambda i: (0, 0)),
                pl.BlockSpec((1, dim_hidden), lambda i: (0, 0)),
                pl.BlockSpec((dim_hidden, _LANES), lambda i: (0, 0)),
                pl.BlockSpec((1, _LANES), lambda i: (0, 0)),
            ],
            out_specs=pl.BlockSpec((tile_b, _LANES), lambda i: (i, 0)),
        ),
        compiler_params=pltpu.CompilerParams(
            dimension_semantics=("parallel",)),
        cost_estimate=pl.CostEstimate(
            flops=flops,
            transcendentals=padded_batch * _LANES,
            bytes_accessed=bytes_accessed),
    )(x, w1, b1, wh, bh)

    y1 = out[:batch, :n1]
    y2 = out[:batch, _HEAD2_OFFSET:_HEAD2_OFFSET + n2]
    return y1, y2


def init_params(key, dim_input=128, dim_hidden=256, num_classes=(5, 7)):
    """Deterministic synthetic parameters (uniform, roughly nn.Linear scale)."""
    ks = jax.random.split(key, 6)

    def uniform(k, shape, fan_in):
        bound = 1.0 / jnp.sqrt(fan_in)
        return jax.random.uniform(k, shape, jnp.float32, -bound, bound)

    w1 = uniform(ks[0], (dim_input, dim_hidden), dim_input)
    b1 = uniform(ks[1], (1, dim_hidden), dim_input)
    wh1 = uniform(ks[2], (dim_hidden, num_classes[0]), dim_hidden)
    bh1 = uniform(ks[3], (1, num_classes[0]), dim_hidden)
    wh2 = uniform(ks[4], (dim_hidden, num_classes[1]), dim_hidden)
    bh2 = uniform(ks[5], (1, num_classes[1]), dim_hidden)
    return (w1, b1, wh1, bh1, wh2, bh2)


def reference_forward(x, params):
    """Pure-JAX reference for correctness checking."""
    w1, b1, wh1, bh1, wh2, bh2 = params
    h = jnp.maximum(x @ w1 + b1, 0.0)
    y1 = jax.nn.softmax(h @ wh1 + bh1, axis=1)
    y2 = jax.nn.softmax(h @ wh2 + bh2, axis=1)
    return y1, y2


if __name__ == "__main__":
    dim_input, dim_hidden, num_classes = 128, 256, (5, 7)
    batch = 8

    key = jax.random.PRNGKey(0)
    kx, kp = jax.random.split(key)
    x = jax.random.normal(kx, (batch, dim_input), jnp.float32)
    params = init_params(kp, dim_input, dim_hidden, num_classes)

    y1, y2 = classification_model(x, params)
    jax.block_until_ready((y1, y2))

    r1, r2 = reference_forward(x, params)
    assert y1.shape == (batch, num_classes[0]) and y2.shape == (batch, num_classes[1])
    assert jnp.allclose(y1, r1, atol=1e-5, rtol=1e-5)
    assert jnp.allclose(y2, r2, atol=1e-5, rtol=1e-5)
    # Softmax rows must sum to 1 for each head independently.
    assert jnp.allclose(jnp.sum(y1, axis=1), 1.0, atol=1e-5)
    assert jnp.allclose(jnp.sum(y2, axis=1), 1.0, atol=1e-5)

    print("KERNEL_OK")
</pallas_src>

<mosaic_0001>
module attributes {stable_mosaic.version = 11 : i64} {
  func.func @_classification_kernel(%arg0: i32, %arg1: memref<8x128xf32, #tpu.memory_space<vmem>>, %arg2: memref<128x256xf32, #tpu.memory_space<vmem>>, %arg3: memref<1x256xf32, #tpu.memory_space<vmem>>, %arg4: memref<256x128xf32, #tpu.memory_space<vmem>>, %arg5: memref<1x128xf32, #tpu.memory_space<vmem>>, %arg6: memref<8x128xf32, #tpu.memory_space<vmem>>) attributes {dimension_semantics = [#tpu.dimension_semantics<parallel>], iteration_bounds = array<i64: 1>, scalar_prefetch = 0 : i64, scratch_operands = 0 : i64, tpu.core_type = #tpu.core_type<tc>, window_params = [{transform_indices = @transform_0, window_bounds = array<i64: 8, 128>}, {pipeline_mode = #tpu.pipeline_mode<synchronous>, transform_indices = @transform_1, window_bounds = array<i64: 128, 256>}, {pipeline_mode = #tpu.pipeline_mode<synchronous>, transform_indices = @transform_2, window_bounds = array<i64: 1, 256>}, {pipeline_mode = #tpu.pipeline_mode<synchronous>, transform_indices = @transform_3, window_bounds = array<i64: 256, 128>}, {pipeline_mode = #tpu.pipeline_mode<synchronous>, transform_indices = @transform_4, window_bounds = array<i64: 1, 128>}, {transform_indices = @transform_5, window_bounds = array<i64: 8, 128>}]} {
    %c0 = arith.constant 0 : index
    %c0_0 = arith.constant 0 : index
    %0 = vector.load %arg1[%c0, %c0_0] : memref<8x128xf32, #tpu.memory_space<vmem>>, vector<8x128xf32>
    %c0_1 = arith.constant 0 : index
    %c0_2 = arith.constant 0 : index
    %1 = vector.load %arg2[%c0_1, %c0_2] : memref<128x256xf32, #tpu.memory_space<vmem>>, vector<128x256xf32>
    %cst = arith.constant dense<0.000000e+00> : vector<8x256xf32>
    %2 = tpu.matmul %0, %1, %cst {dimension_numbers = #tpu.dot_dimension_numbers<[1], [0], [0], [1], [0, 0, 1, 1], [], []>} : vector<8x128xf32>, vector<128x256xf32>, vector<8x256xf32> -> vector<8x256xf32>
    %c0_3 = arith.constant 0 : index
    %c0_4 = arith.constant 0 : index
    %3 = vector.load %arg3[%c0_3, %c0_4] : memref<1x256xf32, #tpu.memory_space<vmem>>, vector<1x256xf32>
    %4 = vector.broadcast %3 : vector<1x256xf32> to vector<8x256xf32>
    %5 = arith.addf %2, %4 : vector<8x256xf32>
    %cst_5 = arith.constant 0.000000e+00 : f32
    %6 = vector.broadcast %cst_5 : f32 to vector<8x256xf32>
    %7 = arith.maximumf %5, %6 : vector<8x256xf32>
    %c0_6 = arith.constant 0 : index
    %c0_7 = arith.constant 0 : index
    %8 = vector.load %arg4[%c0_6, %c0_7] : memref<256x128xf32, #tpu.memory_space<vmem>>, vector<256x128xf32>
    %cst_8 = arith.constant dense<0.000000e+00> : vector<8x128xf32>
    %9 = tpu.matmul %7, %8, %cst_8 {dimension_numbers = #tpu.dot_dimension_numbers<[1], [0], [0], [1], [0, 0, 1, 1], [], []>} : vector<8x256xf32>, vector<256x128xf32>, vector<8x128xf32> -> vector<8x128xf32>
    %c0_9 = arith.constant 0 : index
    %c0_10 = arith.constant 0 : index
    %10 = vector.load %arg5[%c0_9, %c0_10] : memref<1x128xf32, #tpu.memory_space<vmem>>, vector<1x128xf32>
    %11 = vector.broadcast %10 : vector<1x128xf32> to vector<8x128xf32>
    %12 = arith.addf %9, %11 : vector<8x128xf32>
    %13 = tpu.iota {dimensions = array<i32: 1>} : vector<8x128xi32>
    %c64_i32 = arith.constant 64 : i32
    %14 = vector.broadcast %c64_i32 : i32 to vector<8x128xi32>
    %15 = arith.cmpi sge, %13, %14 : vector<8x128xi32>
    %cst_11 = arith.constant -1.000000e+30 : f32
    %16 = vector.broadcast %cst_11 : f32 to vector<8x128xf32>
    %17 = arith.select %15, %16, %12 : vector<8x128xi1>, vector<8x128xf32>
    %cst_12 = arith.constant dense<0xFF800000> : vector<8xf32>
    %18 = vector.multi_reduction <maximumf>, %17, %cst_12 [1] : vector<8x128xf32> to vector<8xf32>
    %19 = vector.shape_cast %18 : vector<8xf32> to vector<8x1xf32>
    %cst_13 = arith.constant -1.000000e+30 : f32
    %20 = vector.broadcast %cst_13 : f32 to vector<8x128xf32>
    %21 = arith.select %15, %12, %20 : vector<8x128xi1>, vector<8x128xf32>
    %cst_14 = arith.constant dense<0xFF800000> : vector<8xf32>
    %22 = vector.multi_reduction <maximumf>, %21, %cst_14 [1] : vector<8x128xf32> to vector<8xf32>
    %23 = vector.shape_cast %22 : vector<8xf32> to vector<8x1xf32>
    %24 = vector.shape_cast %23 : vector<8x1xf32> to vector<8x1xf32>
    %25 = vector.broadcast %24 : vector<8x1xf32> to vector<8x128xf32>
    %26 = vector.shape_cast %19 : vector<8x1xf32> to vector<8x1xf32>
    %27 = vector.broadcast %26 : vector<8x1xf32> to vector<8x128xf32>
    %28 = arith.select %15, %25, %27 : vector<8x128xi1>, vector<8x128xf32>
    %29 = arith.subf %12, %28 : vector<8x128xf32>
    %30 = math.exp %29 : vector<8x128xf32>
    %cst_15 = arith.constant 0.000000e+00 : f32
    %31 = vector.broadcast %cst_15 : f32 to vector<8x128xf32>
    %32 = arith.select %15, %31, %30 : vector<8x128xi1>, vector<8x128xf32>
    %cst_16 = arith.constant dense<0.000000e+00> : vector<8xf32>
    %33 = vector.multi_reduction <add>, %32, %cst_16 [1] : vector<8x128xf32> to vector<8xf32>
    %34 = vector.shape_cast %33 : vector<8xf32> to vector<8x1xf32>
    %cst_17 = arith.constant 0.000000e+00 : f32
    %35 = vector.broadcast %cst_17 : f32 to vector<8x128xf32>
    %36 = arith.select %15, %30, %35 : vector<8x128xi1>, vector<8x128xf32>
    %cst_18 = arith.constant dense<0.000000e+00> : vector<8xf32>
    %37 = vector.multi_reduction <add>, %36, %cst_18 [1] : vector<8x128xf32> to vector<8xf32>
    %38 = vector.shape_cast %37 : vector<8xf32> to vector<8x1xf32>
    %39 = vector.shape_cast %38 : vector<8x1xf32> to vector<8x1xf32>
    %40 = vector.broadcast %39 : vector<8x1xf32> to vector<8x128xf32>
    %41 = vector.shape_cast %34 : vector<8x1xf32> to vector<8x1xf32>
    %42 = vector.broadcast %41 : vector<8x1xf32> to vector<8x128xf32>
    %43 = arith.select %15, %40, %42 : vector<8x128xi1>, vector<8x128xf32>
    %44 = tpu.reciprocal %43 : vector<8x128xf32> -> vector<8x128xf32>
    %45 = arith.mulf %30, %44 : vector<8x128xf32>
    %c0_19 = arith.constant 0 : index
    %c0_20 = arith.constant 0 : index
    %46 = vector.load %arg6[%c0_19, %c0_20] : memref<8x128xf32, #tpu.memory_space<vmem>>, vector<8x128xf32>
    tpu.vector_store %arg6[%c0_19, %c0_20], %45 {strides = array<i32>} : memref<8x128xf32, #tpu.memory_space<vmem>>, vector<8x128xf32>,
    return
  }
  func.func @transform_0(%arg0: i32) -> (i32, i32) {
    %c0_i32 = arith.constant 0 : i32
    %c0_i32_0 = arith.constant 0 : i32
    return %arg0, %c0_i32 : i32, i32
  }
  func.func @transform_1(%arg0: i32) -> (i32, i32) {
    %c0_i32 = arith.constant 0 : i32
    %c0_i32_0 = arith.constant 0 : i32
    %c0_i32_1 = arith.constant 0 : i32
    return %c0_i32, %c0_i32_0 : i32, i32
  }
  func.func @transform_2(%arg0: i32) -> (i32, i32) {
    %c0_i32 = arith.constant 0 : i32
    %c0_i32_0 = arith.constant 0 : i32
    %c0_i32_1 = arith.constant 0 : i32
    return %c0_i32, %c0_i32_0 : i32, i32
  }
  func.func @transform_3(%arg0: i32) -> (i32, i32) {
    %c0_i32 = arith.constant 0 : i32
    %c0_i32_0 = arith.constant 0 : i32
    %c0_i32_1 = arith.constant 0 : i32
    return %c0_i32, %c0_i32_0 : i32, i32
  }
  func.func @transform_4(%arg0: i32) -> (i32, i32) {
    %c0_i32 = arith.constant 0 : i32
    %c0_i32_0 = arith.constant 0 : i32
    %c0_i32_1 = arith.constant 0 : i32
    return %c0_i32, %c0_i32_0 : i32, i32
  }
  func.func @transform_5(%arg0: i32) -> (i32, i32) {
    %c0_i32 = arith.constant 0 : i32
    %c0_i32_0 = arith.constant 0 : i32
    return %arg0, %c0_i32 : i32, i32
  }
}

</mosaic_0001>

<llo_original>
// kernel: classification_model.1
$region0: #{classification_model.1}
  #allocation0 [shape = 'u32[]', space=smem, size = 0x4, offset = 0x4, fixed_abs, tag = 'smem constant byte address 0x4 - core index']
  #allocation1 [shape = 'u32[144,128]{1,0:T(1,128)}', space=vmem, size = 0x12000, scoped, tag = 'internal scratch']
  %s0 = inlined_call_operand.vmem [shape: f32[8,128], index: 0, kind: input, shape index: {}]
  %s1 = inlined_call_operand.vmem [shape: f32[128,256], index: 1, kind: input, shape index: {}]
  %s2 = inlined_call_operand.vmem [shape: f32[1,256], index: 2, kind: input, shape index: {}]
  %s3 = inlined_call_operand.vmem [shape: f32[256,128], index: 3, kind: input, shape index: {}]
  %s4 = inlined_call_operand.vmem [shape: f32[1,128], index: 4, kind: input, shape index: {}]
  %s5 = inlined_call_operand.vmem [shape: f32[8,128], index: 5, kind: output, shape index: {}]
  %s6 = sld [smem:[#allocation0]]
  $region30: #{classification_model.1} parent=0
    _
  %s8 = ssub.s32 1, %s6
  %s9 = scalar_select 0, %s8, %s6
  // Predicated region
  $region2: #{classification_model.1} parent=0 // pred_check
    _
  $region3: #{classification_model.1} parent=0 // pred_check_branch
    %11 = sbr.rel (0) target = $region5
  $region4: #{classification_model.1} parent=0 // pred_region
    _
  $region5: #{classification_model.1} parent=0 // pred_fallthru
    _
  // Predicated region
  $region6: #{classification_model.1} parent=0 // pred_check
    _
  $region7: #{classification_model.1} parent=0 // pred_check_branch
    %13 = sbr.rel (0) target = $region9
  $region8: #{classification_model.1} parent=0 // pred_region
    _
  $region9: #{classification_model.1} parent=0 // pred_fallthru
    _
  // Predicated region
  $region10: #{classification_model.1} parent=0 // pred_check
    _
  $region11: #{classification_model.1} parent=0 // pred_check_branch
    %15 = sbr.rel (0) target = $region13
  $region12: #{classification_model.1} parent=0 // pred_region
    _
  $region13: #{classification_model.1} parent=0 // pred_fallthru
    _
  // Predicated region
  $region14: #{classification_model.1} parent=0 // pred_check
    _
  $region15: #{classification_model.1} parent=0 // pred_check_branch
    %17 = sbr.rel (0) target = $region17
  $region16: #{classification_model.1} parent=0 // pred_region
    _
  $region17: #{classification_model.1} parent=0 // pred_fallthru
    _
  // Predicated region
  $region18: #{classification_model.1} parent=0 // pred_check
    _
  $region19: #{classification_model.1} parent=0 // pred_check_branch
    %19 = sbr.rel (0) target = $region21
  $region20: #{classification_model.1} parent=0 // pred_region
    _
  $region21: #{classification_model.1} parent=0 // pred_fallthru
    _
  %v20 = vld [vmem:[%s0] sm:$0xff]
  %v21 = vld [vmem:[%s1] sm:$0xff]
  %v22 = vld [vmem:[%s1 + $0x8] sm:$0xff]
  %v23 = vld [vmem:[%s1 + $0x10] sm:$0xff]
  %v24 = vld [vmem:[%s1 + $0x18] sm:$0xff]
  %v25 = vld [vmem:[%s1 + $0x20] sm:$0xff]
  %v26 = vld [vmem:[%s1 + $0x28] sm:$0xff]
  %v27 = vld [vmem:[%s1 + $0x30] sm:$0xff]
  %v28 = vld [vmem:[%s1 + $0x38] sm:$0xff]
  %v29 = vld [vmem:[%s1 + $0x40] sm:$0xff]
  %v30 = vld [vmem:[%s1 + $0x48] sm:$0xff]
  %v31 = vld [vmem:[%s1 + $0x50] sm:$0xff]
  %v32 = vld [vmem:[%s1 + $0x58] sm:$0xff]
  %v33 = vld [vmem:[%s1 + $0x60] sm:$0xff]
  %v34 = vld [vmem:[%s1 + $0x68] sm:$0xff]
  %v35 = vld [vmem:[%s1 + $0x70] sm:$0xff]
  %v36 = vld [vmem:[%s1 + $0x78] sm:$0xff]
  %v37 = vld [vmem:[%s1 + $0x80] sm:$0xff]
  %v38 = vld [vmem:[%s1 + $0x88] sm:$0xff]
  %v39 = vld [vmem:[%s1 + $0x90] sm:$0xff]
  %v40 = vld [vmem:[%s1 + $0x98] sm:$0xff]
  %v41 = vld [vmem:[%s1 + $0xa0] sm:$0xff]
  %v42 = vld [vmem:[%s1 + $0xa8] sm:$0xff]
  %v43 = vld [vmem:[%s1 + $0xb0] sm:$0xff]
  %v44 = vld [vmem:[%s1 + $0xb8] sm:$0xff]
  %v45 = vld [vmem:[%s1 + $0xc0] sm:$0xff]
  %v46 = vld [vmem:[%s1 + $0xc8] sm:$0xff]
  %v47 = vld [vmem:[%s1 + $0xd0] sm:$0xff]
  %v48 = vld [vmem:[%s1 + $0xd8] sm:$0xff]
  %v49 = vld [vmem:[%s1 + $0xe0] sm:$0xff]
  %v50 = vld [vmem:[%s1 + $0xe8] sm:$0xff]
  %v51 = vld [vmem:[%s1 + $0xf0] sm:$0xff]
  %v52 = vld [vmem:[%s1 + $0xf8] sm:$0xff]
  %v53 = vld [vmem:[%s2] sm:$0x3]
  %v55 = vlaneseq
  %v56 = vshrl.u32 %v55, 7
  %v57 = vsub.s32 0, %v56
  %v58 = vrot.slane %v53, %v57
  %v59 = vlaneseq
  %v60 = vshrl.u32 %v59, 7
  %v61 = vsub.s32 1, %v60
  %v62 = vrot.slane %v53, %v61
  %65 = vmatprep.subr.mxu0 %v22
  %66 = vmatpush1.msra.mxu0 %v21
  %67 = vmatprep.subr.mxu0 %v24
  %68 = vmatpush1.msra.mxu0 %v23
  %69 = vmatprep.subr.mxu0 %v26
  %70 = vmatpush1.msra.mxu0 %v25
  %71 = vmatprep.subr.mxu0 %v28
  %72 = vmatpush1.msra.mxu0 %v27
  %73 = vmatprep.subr.mxu0 %v30
  %74 = vmatpush1.msra.mxu0 %v29
  %75 = vmatprep.subr.mxu0 %v32
  %76 = vmatpush1.msra.mxu0 %v31
  %77 = vmatprep.subr.mxu0 %v34
  %78 = vmatpush1.msra.mxu0 %v33
  %79 = vmatprep.subr.mxu0 %v36
  %80 = vmatpush1.msra.mxu0 %v35
  %81 = vmatprep.subr.mxu0 %v38
  %82 = vmatpush1.msra.mxu0 %v37
  %83 = vmatprep.subr.mxu0 %v40
  %84 = vmatpush1.msra.mxu0 %v39
  %85 = vmatprep.subr.mxu0 %v42
  %86 = vmatpush1.msra.mxu0 %v41
  %87 = vmatprep.subr.mxu0 %v44
  %88 = vmatpush1.msra.mxu0 %v43
  %89 = vmatprep.subr.mxu0 %v46
  %90 = vmatpush1.msra.mxu0 %v45
  %91 = vmatprep.subr.mxu0 %v48
  %92 = vmatpush1.msra.mxu0 %v47
  %93 = vmatprep.subr.mxu0 %v50
  %94 = vmatpush1.msra.mxu0 %v49
  %95 = vmatprep.subr.mxu0 %v52
  %96 = vmatpush1.msra.mxu0 %v51
  %97 = vmatprep.subr.mxu0 0.0
  %98 = vmatpush1.msra.mxu0 0.0
  %99 = vmatprep.subr.mxu0 0.0
  %100 = vmatpush1.msra.mxu0 0.0
  %101 = vmatprep.subr.mxu0 0.0
  %102 = vmatpush1.msra.mxu0 0.0
  %103 = vmatprep.subr.mxu0 0.0
  %104 = vmatpush1.msra.mxu0 0.0
  %105 = vmatprep.subr.mxu0 0.0
  %106 = vmatpush1.msra.mxu0 0.0
  %107 = vmatprep.subr.mxu0 0.0
  %108 = vmatpush1.msra.mxu0 0.0
  %109 = vmatprep.subr.mxu0 0.0
  %110 = vmatpush1.msra.mxu0 0.0
  %111 = vmatprep.subr.mxu0 0.0
  %112 = vmatpush1.msra.mxu0 0.0
  %113 = vmatprep.subr.mxu0 0.0
  %114 = vmatpush1.msra.mxu0 0.0
  %115 = vmatprep.subr.mxu0 0.0
  %116 = vmatpush1.msra.mxu0 0.0
  %117 = vmatprep.subr.mxu0 0.0
  %118 = vmatpush1.msra.mxu0 0.0
  %119 = vmatprep.subr.mxu0 0.0
  %120 = vmatpush1.msra.mxu0 0.0
  %121 = vmatprep.subr.mxu0 0.0
  %122 = vmatpush1.msra.mxu0 0.0
  %123 = vmatprep.subr.mxu0 0.0
  %124 = vmatpush1.msra.mxu0 0.0
  %125 = vmatprep.subr.mxu0 0.0
  %126 = vmatpush1.msra.mxu0 0.0
  %127 = vmatprep.subr.mxu0 0.0
  %128 = vmatpush1.msra.mxu0 0.0
  %129 = vmatprep.mubr.f32.mxu0 0.0
  %130 = vmatmul.mubr.f32.gmra.mrb[0].mxu0 %v20
  %v131 = vpop.f32.mrb[0].mxu0
  %v132 = vadd.f32 %v58, %v131
  %v133 = vpop.f32.mrb[0].mxu0
  %v134 = vadd.f32 %v62, %v133
  %135 = vdwg.mxu0
  %v136 = vmax.f32 %v132, 0.0
  %v137 = vmax.f32 %v134, 0.0
  %v138 = vld [vmem:[%s3] sm:$0xff]
  %v139 = vld [vmem:[%s3 + $0x8] sm:$0xff]
  %v140 = vld [vmem:[%s3 + $0x10] sm:$0xff]
  %v141 = vld [vmem:[%s3 + $0x18] sm:$0xff]
  %v142 = vld [vmem:[%s3 + $0x20] sm:$0xff]
  %v143 = vld [vmem:[%s3 + $0x28] sm:$0xff]
  %v144 = vld [vmem:[%s3 + $0x30] sm:$0xff]
  %v145 = vld [vmem:[%s3 + $0x38] sm:$0xff]
  %v146 = vld [vmem:[%s3 + $0x40] sm:$0xff]
  %v147 = vld [vmem:[%s3 + $0x48] sm:$0xff]
  %v148 = vld [vmem:[%s3 + $0x50] sm:$0xff]
  %v149 = vld [vmem:[%s3 + $0x58] sm:$0xff]
  %v150 = vld [vmem:[%s3 + $0x60] sm:$0xff]
  %v151 = vld [vmem:[%s3 + $0x68] sm:$0xff]
  %v152 = vld [vmem:[%s3 + $0x70] sm:$0xff]
  %v153 = vld [vmem:[%s3 + $0x78] sm:$0xff]
  %v154 = vld [vmem:[%s3 + $0x80] sm:$0xff]
  %v155 = vld [vmem:[%s3 + $0x88] sm:$0xff]
  %v156 = vld [vmem:[%s3 + $0x90] sm:$0xff]
  %v157 = vld [vmem:[%s3 + $0x98] sm:$0xff]
  %v158 = vld [vmem:[%s3 + $0xa0] sm:$0xff]
  %v159 = vld [vmem:[%s3 + $0xa8] sm:$0xff]
  %v160 = vld [vmem:[%s3 + $0xb0] sm:$0xff]
  %v161 = vld [vmem:[%s3 + $0xb8] sm:$0xff]
  %v162 = vld [vmem:[%s3 + $0xc0] sm:$0xff]
  %v163 = vld [vmem:[%s3 + $0xc8] sm:$0xff]
  %v164 = vld [vmem:[%s3 + $0xd0] sm:$0xff]
  %v165 = vld [vmem:[%s3 + $0xd8] sm:$0xff]
  %v166 = vld [vmem:[%s3 + $0xe0] sm:$0xff]
  %v167 = vld [vmem:[%s3 + $0xe8] sm:$0xff]
  %v168 = vld [vmem:[%s3 + $0xf0] sm:$0xff]
  %v169 = vld [vmem:[%s3 + $0xf8] sm:$0xff]
  %v170 = vld [vmem:[%s4] sm:$0x1]
  %v172 = vlaneseq
  %v173 = vshrl.u32 %v172, 7
  %v174 = vsub.s32 0, %v173
  %v175 = vrot.slane %v170, %v174
  %177 = vmatprep.subr.mxu0 0.0
  %178 = vmatpush1.msra.mxu0 %v138
  %179 = vmatprep.subr.mxu0 0.0
  %180 = vmatpush1.msra.mxu0 %v139
  %181 = vmatprep.subr.mxu0 0.0
  %182 = vmatpush1.msra.mxu0 %v140
  %183 = vmatprep.subr.mxu0 0.0
  %184 = vmatpush1.msra.mxu0 %v141
  %185 = vmatprep.subr.mxu0 0.0
  %186 = vmatpush1.msra.mxu0 %v142
  %187 = vmatprep.subr.mxu0 0.0
  %188 = vmatpush1.msra.mxu0 %v143
  %189 = vmatprep.subr.mxu0 0.0
  %190 = vmatpush1.msra.mxu0 %v144
  %191 = vmatprep.subr.mxu0 0.0
  %192 = vmatpush1.msra.mxu0 %v145
  %193 = vmatprep.subr.mxu0 0.0
  %194 = vmatpush1.msra.mxu0 %v146
  %195 = vmatprep.subr.mxu0 0.0
  %196 = vmatpush1.msra.mxu0 %v147
  %197 = vmatprep.subr.mxu0 0.0
  %198 = vmatpush1.msra.mxu0 %v148
  %199 = vmatprep.subr.mxu0 0.0
  %200 = vmatpush1.msra.mxu0 %v149
  %201 = vmatprep.subr.mxu0 0.0
  %202 = vmatpush1.msra.mxu0 %v150
  %203 = vmatprep.subr.mxu0 0.0
  %204 = vmatpush1.msra.mxu0 %v151
  %205 = vmatprep.subr.mxu0 0.0
  %206 = vmatpush1.msra.mxu0 %v152
  %207 = vmatprep.subr.mxu0 0.0
  %208 = vmatpush1.msra.mxu0 %v153
  %209 = vmatprep.subr.mxu0 0.0
  %210 = vmatpush1.msra.mxu0 %v154
  %211 = vmatprep.subr.mxu0 0.0
  %212 = vmatpush1.msra.mxu0 %v155
  %213 = vmatprep.subr.mxu0 0.0
  %214 = vmatpush1.msra.mxu0 %v156
  %215 = vmatprep.subr.mxu0 0.0
  %216 = vmatpush1.msra.mxu0 %v157
  %217 = vmatprep.subr.mxu0 0.0
  %218 = vmatpush1.msra.mxu0 %v158
  %219 = vmatprep.subr.mxu0 0.0
  %220 = vmatpush1.msra.mxu0 %v159
  %221 = vmatprep.subr.mxu0 0.0
  %222 = vmatpush1.msra.mxu0 %v160
  %223 = vmatprep.subr.mxu0 0.0
  %224 = vmatpush1.msra.mxu0 %v161
  %225 = vmatprep.subr.mxu0 0.0
  %226 = vmatpush1.msra.mxu0 %v162
  %227 = vmatprep.subr.mxu0 0.0
  %228 = vmatpush1.msra.mxu0 %v163
  %229 = vmatprep.subr.mxu0 0.0
  %230 = vmatpush1.msra.mxu0 %v164
  %231 = vmatprep.subr.mxu0 0.0
  %232 = vmatpush1.msra.mxu0 %v165
  %233 = vmatprep.subr.mxu0 0.0
  %234 = vmatpush1.msra.mxu0 %v166
  %235 = vmatprep.subr.mxu0 0.0
  %236 = vmatpush1.msra.mxu0 %v167
  %237 = vmatprep.subr.mxu0 0.0
  %238 = vmatpush1.msra.mxu0 %v168
  %239 = vmatprep.subr.mxu0 0.0
  %240 = vmatpush1.msra.mxu0 %v169
  %241 = vmatprep.mubr.f32.mxu0 %v137
  %242 = vmatmul.mubr.f32.gmra.mrb[0].mxu0 %v136
  %v243 = vpop.f32.mrb[0].mxu0
  %v244 = vadd.f32 %v175, %v243
  %v245 = vpop.f32.mrb[0].mxu0
  %246 = vdwg.mxu0
  %v247 = vlaneseq
  %v248 = vand.u32 %v247, 127
  %vm249 = vcmp.ge.s32.totalorder %v248, 64
  %v250 = vsel %vm249, -1e+30, %v244
  %251 = vmax.xlane.f32.xlu0 %v250
  %v252 = vpop.xlane.xlu0 %251
  %v253 = vsel %vm249, %v244, -1e+30
  %254 = vmax.xlane.f32.xlu0 %v253
  %v255 = vpop.xlane.xlu0 %254
  %v256 = vsel %vm249, %v255, %v252
  %v257 = vsub.f32 %v244, %v256
  %v258 = vmul.f32 %v257, 1.442695
  %v259 = vpow.pop %v258
  %v260 = vsel %vm249, 0.0, %v259
  %261 = vadd.xlane.f32.xlu0 %v260
  %v262 = vpop.xlane.xlu0 %261
  %v263 = vsel %vm249, %v259, 0.0
  %264 = vadd.xlane.f32.xlu0 %v263
  %v265 = vpop.xlane.xlu0 %264
  %v266 = vsel %vm249, %v265, %v262
  %v267 = vrcp.pop %v266
  %v268 = vmul.f32 %v259, %v267
  %269 = vst [vmem:[%s5] sm:$0xff] %v268
  // Predicated region
  $region22: #{classification_model.1} parent=0 // pred_check
    _
  $region23: #{classification_model.1} parent=0 // pred_check_branch
    %271 = sbr.rel (0) target = $region25
  $region24: #{classification_model.1} parent=0 // pred_region
    _
  $region25: #{classification_model.1} parent=0 // pred_fallthru
    _
  // Predicated region
  $region26: #{classification_model.1} parent=0 // pred_check
    _
  $region27: #{classification_model.1} parent=0 // pred_check_branch
    %273 = sbr.rel (0) target = $region29
  $region28: #{classification_model.1} parent=0 // pred_region
    _
  $region29: #{classification_model.1} parent=0 // pred_fallthru
    _

</llo_original>
